<compile_context>
chip_gen: v7x
topology: tpu7x:2x2x1
jax: 0.10.0
libtpu: 0.0.40
codegen_flags: <defaults>
</compile_context>

<pallas_src>
import numpy as np
import jax
import jax.numpy as jnp
from jax.experimental import pallas as pl
from jax.experimental.pallas import tpu as pltpu


# ----------------------------------------------------------------------------
# Fused Linear + BatchNorm1d kernel (single matmul per feature tile + epilogue)
# ----------------------------------------------------------------------------
def make_linear_bn_kernel(batch_real: int, batch_padded: int, eps: float):
    inv_b = 1.0 / float(batch_real)
    needs_mask = batch_padded != batch_real

    def kernel(x_ref, w_ref, g_ref, bt_ref, o_ref):
        # bf16 MXU operands, f32 accumulation.  x block is the full (Bp, K)
        # activation (resident across the whole grid), w block is (K, tf).
        y = jnp.dot(x_ref[...], w_ref[...], preferred_element_type=jnp.float32)

        if needs_mask:
            # Padded batch rows must not contaminate the BN statistics.
            row = jax.lax.broadcasted_iota(jnp.int32, y.shape, 0)
            valid = row < batch_real
            y_m = jnp.where(valid, y, 0.0)
            mean = jnp.sum(y_m, axis=0, keepdims=True) * inv_b       # (1, tf)
            d = y - mean
            d_m = jnp.where(valid, d, 0.0)
            var = jnp.sum(d_m * d_m, axis=0, keepdims=True) * inv_b  # biased
        else:
            mean = jnp.sum(y, axis=0, keepdims=True) * inv_b         # (1, tf)
            d = y - mean
            var = jnp.sum(d * d, axis=0, keepdims=True) * inv_b      # biased

        inv_std = jax.lax.rsqrt(var + eps)
        o_ref[...] = d * inv_std * g_ref[...] + bt_ref[...]

    return kernel


def _pick_tf(F: int) -> int:
    """Largest multiple-of-128 divisor of F, capped at 512, keeping >= 2 grid
    steps so the parallel axis can be sharded across v7x's two TensorCores."""
    best = None
    cand = 128
    while cand <= min(512, F):
        if F % cand == 0 and (F // cand) >= 2:
            best = cand
        cand += 128
    return best if best is not None else F


def linear_bn_pallas(x, w_bf16, gamma, beta, *, eps=1e-5, tf=None):
    """x: (B, K) float; w_bf16: (K, F) bf16; gamma/beta: (1, F) f32 -> (B, F) f32.

    NOTE: the Linear bias is intentionally NOT an input — training-mode
    BatchNorm's mean subtraction cancels it exactly, so it is dead work.
    """
    B, K = x.shape
    F = w_bf16.shape[1]
    if tf is None:
        tf = _pick_tf(F)
    assert F % tf == 0, (F, tf)

    # Pad batch to a multiple of 8 so sublanes are full; padded rows are masked
    # out of the BN statistics inside the kernel and sliced off afterwards.
    Bp = ((B + 7) // 8) * 8
    x = x.astype(jnp.bfloat16)                 # pre-cast: halves x DMA bytes
    if Bp != B:
        x = jnp.pad(x, ((0, Bp - B), (0, 0)))

    out = pl.pallas_call(
        make_linear_bn_kernel(B, Bp, eps),
        out_shape=jax.ShapeDtypeStruct((Bp, F), jnp.float32),
        grid_spec=pltpu.PrefetchScalarGridSpec(
            num_scalar_prefetch=0,
            grid=(F // tf,),                                 # feature tiles only
            in_specs=[
                pl.BlockSpec((Bp, K), lambda i: (0, 0)),     # activations (resident)
                pl.BlockSpec((K, tf), lambda i: (0, i)),     # bf16 weight stream
                pl.BlockSpec((1, tf), lambda i: (0, i)),     # BN gamma
                pl.BlockSpec((1, tf), lambda i: (0, i)),     # BN beta
            ],
            out_specs=pl.BlockSpec((Bp, tf), lambda i: (0, i)),
        ),
        compiler_params=pltpu.CompilerParams(
            dimension_semantics=("parallel",),
            # 2x(K, tf) bf16 weight buffers + x + out stay far below this on
            # all of v5e/v6e/v7x (v7x scoped cap is the one to watch).
            vmem_limit_bytes=32 * 1024 * 1024,
        ),
    )(x, w_bf16, gamma, beta)
    return out[:B] if Bp != B else out


# ----------------------------------------------------------------------------
# ImageEnc forward
# ----------------------------------------------------------------------------
def image_enc_forward(params, resout):
    # TODO(synk): the frozen pretrained ResNet-152 backbone (models.resnet152(
    # pretrained=True) minus its fc) is not reimplementable in-script (needs
    # downloaded weights); `resout` is that backbone's pooled (B, C, 1, 1) output.
    B = resout.shape[0]
    feats = resout.reshape(B, -1).astype(jnp.float32)      # resout.reshape(B, -1)
    return linear_bn_pallas(
        feats, params["w_lin"], params["bn_gamma"], params["bn_beta"]
    )


# ----------------------------------------------------------------------------
# Pure-JAX reference (training-mode BatchNorm1d forward, f32 matmul, WITH bias)
# ----------------------------------------------------------------------------
def image_enc_ref(params, resout, eps=1e-5):
    B = resout.shape[0]
    feats = resout.reshape(B, -1).astype(jnp.float32)
    y = feats @ params["w_lin"].astype(jnp.float32) + params["b_lin"]
    mean = jnp.mean(y, axis=0, keepdims=True)
    var = jnp.mean((y - mean) ** 2, axis=0, keepdims=True)  # biased, as PyTorch BN
    return (y - mean) / jnp.sqrt(var + eps) * params["bn_gamma"] + params["bn_beta"]


# ----------------------------------------------------------------------------
if __name__ == "__main__":
    # Small config consistent with ImageEnc: ResNet-152 has in_features=2048;
    # kept small here (512 -> ftsize 256) while staying (8, 128)-tile friendly.
    in_features = 512
    ftsize = 256
    B = 8

    key = jax.random.PRNGKey(0)
    k0, k1, k2, k3, k4 = jax.random.split(key, 5)

    params = {
        # Linear weight stored pre-transposed (K, F) and in bf16 (MXU operand dtype).
        "w_lin": (jax.random.normal(k0, (in_features, ftsize), jnp.float32)
                  / np.sqrt(in_features)).astype(jnp.bfloat16),
        # Kept only for the reference: training-mode BN cancels the bias exactly,
        # so the Pallas kernel does not consume it.
        "b_lin": 0.1 * jax.random.normal(k1, (1, ftsize), jnp.float32),
        "bn_gamma": 1.0 + 0.1 * jax.random.normal(k2, (1, ftsize), jnp.float32),
        "bn_beta": 0.1 * jax.random.normal(k3, (1, ftsize), jnp.float32),
    }

    # Stand-in for the ResNet-152 backbone's pooled output (B, C, 1, 1).
    resout = jax.random.normal(k4, (B, in_features, 1, 1), jnp.float32)

    out = jax.block_until_ready(image_enc_forward(params, resout))
    ref = jax.block_until_ready(image_enc_ref(params, resout))

    assert out.shape == (B, ftsize), out.shape
    # Loose tolerance: kernel uses bf16 MXU operands (f32 accumulation).
    np.testing.assert_allclose(np.asarray(out), np.asarray(ref), rtol=3e-2, atol=3e-2)

    print("KERNEL_OK")
</pallas_src>

<mosaic_0001>
module attributes {stable_mosaic.version = 11 : i64} {
  func.func @kernel(%arg0: i32, %arg1: memref<8x512xbf16, #tpu.memory_space<vmem>>, %arg2: memref<512x128xbf16, #tpu.memory_space<vmem>>, %arg3: memref<1x128xf32, #tpu.memory_space<vmem>>, %arg4: memref<1x128xf32, #tpu.memory_space<vmem>>, %arg5: memref<8x128xf32, #tpu.memory_space<vmem>>) attributes {dimension_semantics = [#tpu.dimension_semantics<parallel>], iteration_bounds = array<i64: 2>, scalar_prefetch = 0 : i64, scratch_operands = 0 : i64, tpu.core_type = #tpu.core_type<tc>, window_params = [{pipeline_mode = #tpu.pipeline_mode<synchronous>, transform_indices = @transform_0, window_bounds = array<i64: 8, 512>}, {transform_indices = @transform_1, window_bounds = array<i64: 512, 128>}, {transform_indices = @transform_2, window_bounds = array<i64: 1, 128>}, {transform_indices = @transform_3, window_bounds = array<i64: 1, 128>}, {transform_indices = @transform_4, window_bounds = array<i64: 8, 128>}]} {
    %c0 = arith.constant 0 : index
    %c0_0 = arith.constant 0 : index
    %0 = vector.load %arg1[%c0, %c0_0] : memref<8x512xbf16, #tpu.memory_space<vmem>>, vector<8x512xbf16>
    %c0_1 = arith.constant 0 : index
    %c0_2 = arith.constant 0 : index
    %1 = vector.load %arg2[%c0_1, %c0_2] : memref<512x128xbf16, #tpu.memory_space<vmem>>, vector<512x128xbf16>
    %cst = arith.constant dense<0.000000e+00> : vector<8x128xf32>
    %2 = tpu.matmul %0, %1, %cst {dimension_numbers = #tpu.dot_dimension_numbers<[1], [0], [0], [1], [0, 0, 1, 1], [], []>} : vector<8x512xbf16>, vector<512x128xbf16>, vector<8x128xf32> -> vector<8x128xf32>
    %cst_3 = arith.constant dense<0.000000e+00> : vector<128xf32>
    %3 = vector.multi_reduction <add>, %2, %cst_3 [0] : vector<8x128xf32> to vector<128xf32>
    %4 = vector.shape_cast %3 : vector<128xf32> to vector<1x128xf32>
    %cst_4 = arith.constant 1.250000e-01 : f32
    %5 = vector.broadcast %cst_4 : f32 to vector<1x128xf32>
    %6 = arith.mulf %4, %5 : vector<1x128xf32>
    %7 = vector.broadcast %6 : vector<1x128xf32> to vector<8x128xf32>
    %8 = arith.subf %2, %7 : vector<8x128xf32>
    %9 = arith.mulf %8, %8 : vector<8x128xf32>
    %cst_5 = arith.constant dense<0.000000e+00> : vector<128xf32>
    %10 = vector.multi_reduction <add>, %9, %cst_5 [0] : vector<8x128xf32> to vector<128xf32>
    %11 = vector.shape_cast %10 : vector<128xf32> to vector<1x128xf32>
    %cst_6 = arith.constant 1.250000e-01 : f32
    %12 = vector.broadcast %cst_6 : f32 to vector<1x128xf32>
    %13 = arith.mulf %11, %12 : vector<1x128xf32>
    %cst_7 = arith.constant 9.99999974E-6 : f32
    %14 = vector.broadcast %cst_7 : f32 to vector<1x128xf32>
    %15 = arith.addf %13, %14 : vector<1x128xf32>
    %16 = math.rsqrt %15 : vector<1x128xf32>
    %17 = vector.broadcast %16 : vector<1x128xf32> to vector<8x128xf32>
    %18 = arith.mulf %8, %17 : vector<8x128xf32>
    %c0_8 = arith.constant 0 : index
    %c0_9 = arith.constant 0 : index
    %19 = vector.load %arg3[%c0_8, %c0_9] : memref<1x128xf32, #tpu.memory_space<vmem>>, vector<1x128xf32>
    %20 = vector.broadcast %19 : vector<1x128xf32> to vector<8x128xf32>
    %21 = arith.mulf %18, %20 : vector<8x128xf32>
    %c0_10 = arith.constant 0 : index
    %c0_11 = arith.constant 0 : index
    %22 = vector.load %arg4[%c0_10, %c0_11] : memref<1x128xf32, #tpu.memory_space<vmem>>, vector<1x128xf32>
    %23 = vector.broadcast %22 : vector<1x128xf32> to vector<8x128xf32>
    %24 = arith.addf %21, %23 : vector<8x128xf32>
    %c0_12 = arith.constant 0 : index
    %c0_13 = arith.constant 0 : index
    %25 = vector.load %arg5[%c0_12, %c0_13] : memref<8x128xf32, #tpu.memory_space<vmem>>, vector<8x128xf32>
    tpu.vector_store %arg5[%c0_12, %c0_13], %24 {strides = array<i32>} : memref<8x128xf32, #tpu.memory_space<vmem>>, vector<8x128xf32>,
    return
  }
  func.func @transform_0(%arg0: i32) -> (i32, i32) {
    %c0_i32 = arith.constant 0 : i32
    %c0_i32_0 = arith.constant 0 : i32
    %c0_i32_1 = arith.constant 0 : i32
    return %c0_i32, %c0_i32_0 : i32, i32
  }
  func.func @transform_1(%arg0: i32) -> (i32, i32) {
    %c0_i32 = arith.constant 0 : i32
    %c0_i32_0 = arith.constant 0 : i32
    return %c0_i32, %arg0 : i32, i32
  }
  func.func @transform_2(%arg0: i32) -> (i32, i32) {
    %c0_i32 = arith.constant 0 : i32
    %c0_i32_0 = arith.constant 0 : i32
    return %c0_i32, %arg0 : i32, i32
  }
  func.func @transform_3(%arg0: i32) -> (i32, i32) {
    %c0_i32 = arith.constant 0 : i32
    %c0_i32_0 = arith.constant 0 : i32
    return %c0_i32, %arg0 : i32, i32
  }
  func.func @transform_4(%arg0: i32) -> (i32, i32) {
    %c0_i32 = arith.constant 0 : i32
    %c0_i32_0 = arith.constant 0 : i32
    return %c0_i32, %arg0 : i32, i32
  }
}

</mosaic_0001>

<llo_original>
// kernel: tpu_custom_call.1
$region0: #{tpu_custom_call.1}
  #allocation0 [shape = 'u32[]', space=smem, size = 0x4, offset = 0x4, fixed_abs, tag = 'smem constant byte address 0x4 - core index']
  #allocation1 [shape = 'u32[144,128]{1,0:T(1,128)}', space=vmem, size = 0x12000, scoped, tag = 'internal scratch']
  %s0 = inlined_call_operand.hbm [shape: bf16[8,512], index: 0, kind: input, shape index: {}]
  %s1 = inlined_call_operand.hbm [shape: bf16[512,256], index: 1, kind: input, shape index: {}]
  %s2 = inlined_call_operand.vmem [shape: f32[1,256], index: 2, kind: input, shape index: {}]
  %s3 = inlined_call_operand.vmem [shape: f32[1,256], index: 3, kind: input, shape index: {}]
  %s4 = inlined_call_operand.hbm [shape: f32[8,256], index: 4, kind: output, shape index: {}]
  %s5 = sld [smem:[#allocation0]]
  $region57: #{tpu_custom_call.1} parent=0
    _
  %s7 = ssub.s32 1, %s5
  %s8 = scalar_select 0, %s7, %s5
  $region1: #{tpu_custom_call.1} parent=0
    #allocation2 [shape = 'u8[8192]{0}', space=vmem, size = 0x2000, scoped, tag = 'input window, operand 0, single buffered']
    #allocation3 [shape = 's32[2]{0}', space=sflag, size = 0x8, scoped, tag = 'scoped memory for tpu_custom_call.1']
    #allocation4 [shape = 's32[2]{0}', space=sflag, size = 0x8, scoped, tag = 'scoped memory for tpu_custom_call.1']
    #allocation5 [shape = 'u8[262144]{0}', space=vmem, size = 0x40000, scoped, tag = 'input window, operand 1']
    #allocation6 [shape = 's32[2]{0}', space=sflag, size = 0x8, scoped, tag = 'scoped memory for tpu_custom_call.1']
    #allocation7 [shape = 'u8[8192]{0}', space=vmem, size = 0x2000, scoped, tag = 'output window, operand 0']
    %9 = vsyncpa [#allocation3], 0
    %10 = vsyncpa [#allocation6], 0
    %s11 = scalar_lea.sflag [#allocation6], 1
    %12 = vsyncpa %s11, 0
    %13 = vsyncpa [#allocation4], 0
    %s14 = scalar_lea.sflag [#allocation4], 1
    %15 = vsyncpa %s14, 0
    loop: start=0, step=1, limit=4
    $region2: #{tpu_custom_call.1} parent=1 // loop_pre_header
      _
    $region3: #{tpu_custom_call.1} parent=1 // loop_header
      %s17 = sphi 0, %s21
      %p18 = scmp.ge.s32.totalorder %s17, 4
      %s25 = sphi 0, %s25
      %s27 = sphi 0, %s25
      %s28 = sphi 0, %s27
      %s42 = sphi 0, %s28
      %s48 = sphi 0, %s50
      %s51 = sphi 0, %s48
      %s52 = sphi 0, %s51
      %s68 = sphi 0, %s52
      %s74 = sphi 0, %s76
      %s77 = sphi 0, %s74
      %s78 = sphi 0, %s77
      %s94 = sphi 0, %s78
      %s100 = sphi 0, %s102
      %s103 = sphi 0, %s100
      %s104 = sphi 0, %s103
      %s120 = sphi 0, %s104
      %s126 = sphi 0, %s128
      %s129 = sphi 0, %s126
      %s130 = sphi 0, %s129
      %s146 = sphi 0, %s130
    $region4: #{tpu_custom_call.1} parent=1 // loop_header_branch
      %20 = sbr.rel (%p18) target = $region8
    $region5: #{tpu_custom_call.1} parent=1 // loop_body
      %s22 = ssub.s32 %s17, 1
      %s23 = ssub.s32 %s17, 2
      %s24 = sadd.s32 %s17, 1
      %s26 = sadd.s32 %s25, 1
      %p29 = scmp.eq.s32.totalorder %s17, 1
      %p30 = scmp.ne.s32.totalorder %s25, %s27
      %p31 = scmp.eq.s32.totalorder %s17, 0
      %p32 = por %p30, %p31
      %p33 = scmp.ne.s32.totalorder %s25, %s27
      %p34 = scmp.eq.s32.totalorder %s22, 1
      %p35 = por %p33, %p34
      %p36 = scmp.ne.s32.totalorder %s27, %s28
      %p37 = scmp.eq.s32.totalorder %s22, 0
      %p38 = por %p36, %p37
      %p39 = scmp.ne.s32.totalorder %s27, %s28
      %p40 = scmp.eq.s32.totalorder %s23, 1
      %p41 = por %p39, %p40
      %p43 = scmp.ne.s32.totalorder %s28, %s42
      %p44 = scmp.eq.s32.totalorder %s23, 0
      %p45 = por %p43, %p44
      %s46 = ssub.s32 %s17, %s24
      %p47 = scmp.eq.s32.totalorder %s46, 0
      %s49 = sadd.s32 %s48, 1
      %s50 = scalar_select %p47, %s48, %s49
      %p53 = pneg %p47
      %p54 = scmp.eq.s32.totalorder %s17, 1
      %p55 = por %p53, %p54
      %p56 = scmp.ne.s32.totalorder %s48, %s51
      %p57 = scmp.eq.s32.totalorder %s17, 0
      %p58 = por %p56, %p57
      %p59 = scmp.ne.s32.totalorder %s48, %s51
      %p60 = scmp.eq.s32.totalorder %s22, 1
      %p61 = por %p59, %p60
      %p62 = scmp.ne.s32.totalorder %s51, %s52
      %p63 = scmp.eq.s32.totalorder %s22, 0
      %p64 = por %p62, %p63
      %p65 = scmp.ne.s32.totalorder %s51, %s52
      %p66 = scmp.eq.s32.totalorder %s23, 1
      %p67 = por %p65, %p66
      %p69 = scmp.ne.s32.totalorder %s52, %s68
      %p70 = scmp.eq.s32.totalorder %s23, 0
      %p71 = por %p69, %p70
      %s72 = ssub.s32 %s17, %s24
      %p73 = scmp.eq.s32.totalorder %s72, 0
      %s75 = sadd.s32 %s74, 1
      %s76 = scalar_select %p73, %s74, %s75
      %p79 = pneg %p73
      %p80 = scmp.eq.s32.totalorder %s17, 1
      %p81 = por %p79, %p80
      %p82 = scmp.ne.s32.totalorder %s74, %s77
      %p83 = scmp.eq.s32.totalorder %s17, 0
      %p84 = por %p82, %p83
      %p85 = scmp.ne.s32.totalorder %s74, %s77
      %p86 = scmp.eq.s32.totalorder %s22, 1
      %p87 = por %p85, %p86
      %p88 = scmp.ne.s32.totalorder %s77, %s78
      %p89 = scmp.eq.s32.totalorder %s22, 0
      %p90 = por %p88, %p89
      %p91 = scmp.ne.s32.totalorder %s77, %s78
      %p92 = scmp.eq.s32.totalorder %s23, 1
      %p93 = por %p91, %p92
      %p95 = scmp.ne.s32.totalorder %s78, %s94
      %p96 = scmp.eq.s32.totalorder %s23, 0
      %p97 = por %p95, %p96
      %s98 = ssub.s32 %s17, %s24
      %p99 = scmp.eq.s32.totalorder %s98, 0
      %s101 = sadd.s32 %s100, 1
      %s102 = scalar_select %p99, %s100, %s101
      %p105 = pneg %p99
      %p106 = scmp.eq.s32.totalorder %s17, 1
      %p107 = por %p105, %p106
      %p108 = scmp.ne.s32.totalorder %s100, %s103
      %p109 = scmp.eq.s32.totalorder %s17, 0
      %p110 = por %p108, %p109
      %p111 = scmp.ne.s32.totalorder %s100, %s103
      %p112 = scmp.eq.s32.totalorder %s22, 1
      %p113 = por %p111, %p112
      %p114 = scmp.ne.s32.totalorder %s103, %s104
      %p115 = scmp.eq.s32.totalorder %s22, 0
      %p116 = por %p114, %p115
      %p117 = scmp.ne.s32.totalorder %s103, %s104
      %p118 = scmp.eq.s32.totalorder %s23, 1
      %p119 = por %p117, %p118
      %p121 = scmp.ne.s32.totalorder %s104, %s120
      %p122 = scmp.eq.s32.totalorder %s23, 0
      %p123 = por %p121, %p122
      %s124 = ssub.s32 %s17, %s24
      %p125 = scmp.eq.s32.totalorder %s124, 0
      %s127 = sadd.s32 %s126, 1
      %s128 = scalar_select %p125, %s126, %s127
      %p131 = pneg %p125
      %p132 = scmp.eq.s32.totalorder %s17, 1
      %p133 = por %p131, %p132
      %p134 = scmp.ne.s32.totalorder %s126, %s129
      %p135 = scmp.eq.s32.totalorder %s17, 0
      %p136 = por %p134, %p135
      %p137 = scmp.ne.s32.totalorder %s126, %s129
      %p138 = scmp.eq.s32.totalorder %s22, 1
      %p139 = por %p137, %p138
      %p140 = scmp.ne.s32.totalorder %s129, %s130
      %p141 = scmp.eq.s32.totalorder %s22, 0
      %p142 = por %p140, %p141
      %p143 = scmp.ne.s32.totalorder %s129, %s130
      %p144 = scmp.eq.s32.totalorder %s23, 1
      %p145 = por %p143, %p144
      %p147 = scmp.ne.s32.totalorder %s130, %s146
      %p148 = scmp.eq.s32.totalorder %s23, 0
      %p149 = por %p147, %p148
      %p150 = scmp.le.s32.totalorder 1, %s17
      %p151 = scmp.lt.s32.totalorder %s17, 3
      %p152 = pnand %p150, %p151
      %p153 = pneg %p152
      // Predicated region
      $region9: #{tpu_custom_call.1} parent=5 // pred_check
        _
      $region10: #{tpu_custom_call.1} parent=5 // pred_check_branch
        %155 = sbr.rel (%p152) target = $region12
      $region11: #{tpu_custom_call.1} parent=5 // pred_region
        %s156 = ssub.s32 %s17, 1
        // Predicated region
        $region13: #{tpu_custom_call.1} parent=11 // pred_check
          %p157 = pneg %p38
        $region14: #{tpu_custom_call.1} parent=11 // pred_check_branch
          %159 = sbr.rel (%p157) target = $region16
        $region15: #{tpu_custom_call.1} parent=11 // pred_region
          %s161 = ssub.s32 256, 256
          %162 = vsyncadd [#allocation3], %s161
          %s164 = sshll.u32 [#allocation2], 4
          %s165 = int_to_ptr.vmem [resolvable:$true] %s164
          %167 = dma.hbm_to_vmem [thread:$0]  %s0, 256, %s165, [#allocation3]
        $region16: #{tpu_custom_call.1} parent=11 // pred_fallthru
          _
      $region12: #{tpu_custom_call.1} parent=5 // pred_fallthru
        _
      %p168 = scmp.lt.s32.totalorder %s17, 2
      // Predicated region
      $region17: #{tpu_custom_call.1} parent=5 // pred_check
        %p169 = pneg %p168
      $region18: #{tpu_custom_call.1} parent=5 // pred_check_branch
        %171 = sbr.rel (%p169) target = $region20
      $region19: #{tpu_custom_call.1} parent=5 // pred_region
        // Predicated region
        $region21: #{tpu_custom_call.1} parent=19 // pred_check
          %p172 = pneg %p58
        $region22: #{tpu_custom_call.1} parent=19 // pred_check_branch
          %174 = sbr.rel (%p172) target = $region24
        $region23: #{tpu_custom_call.1} parent=19 // pred_region
          %s175 = sand.u32 %s48, 1
          %s176 = scalar_lea.sflag [#allocation6], %s175
          %s177 = sand.u32 %s48, 1
          %s178 = smul.addr %s177, 256
          %s179 = scalar_lea.vmem [#allocation5], %s178
          %s181 = ssub.s32 4096, 4096
          %182 = vsyncadd %s176, %s181
          %s183 = smul.addr %s17, 64
          %s184 = scalar_lea.hbm %s1, %s183
          %s185 = sshll.u32 %s179, 4
          %s186 = int_to_ptr.vmem [resolvable:$true] %s185
          %191 = dma.hbm_to_vmem [thread:$0]  %s184, 4096, %s186, %s176, 128, 64, 4
        $region24: #{tpu_custom_call.1} parent=19 // pred_fallthru
          _
        // Predicated region
        $region25: #{tpu_custom_call.1} parent=19 // pred_check
          %p192 = pneg %p84
        $region26: #{tpu_custom_call.1} parent=19 // pred_check_branch
          %194 = sbr.rel (%p192) target = $region28
        $region27: #{tpu_custom_call.1} parent=19 // pred_region
          %p195 = scmp.lt.s32.totalorder %s17, 1
          %s196 = scalar_select %p195, %s17, 1
          %s197 = scalar_lea.vmem %s2, %s196
        $region28: #{tpu_custom_call.1} parent=19 // pred_fallthru
          _
        // Predicated region
        $region29: #{tpu_custom_call.1} parent=19 // pred_check
          %p198 = pneg %p110
        $region30: #{tpu_custom_call.1} parent=19 // pred_check_branch
          %200 = sbr.rel (%p198) target = $region32
        $region31: #{tpu_custom_call.1} parent=19 // pred_region
          %p201 = scmp.lt.s32.totalorder %s17, 1
          %s202 = scalar_select %p201, %s17, 1
          %s203 = scalar_lea.vmem %s3, %s202
        $region32: #{tpu_custom_call.1} parent=19 // pred_fallthru
          _
      $region20: #{tpu_custom_call.1} parent=5 // pred_fallthru
        _
      %p204 = scmp.le.s32.totalorder 1, %s17
      %p205 = scmp.lt.s32.totalorder %s17, 3
      %p206 = pnand %p204, %p205
      %p207 = pneg %p206
      // Predicated region
      $region33: #{tpu_custom_call.1} parent=5 // pred_check
        _
      $region34: #{tpu_custom_call.1} parent=5 // pred_check_branch
        %209 = sbr.rel (%p206) target = $region36
      $region35: #{tpu_custom_call.1} parent=5 // pred_region
        %s210 = ssub.s32 %s17, 1
        // Predicated region
        $region37: #{tpu_custom_call.1} parent=35 // pred_check
          %p211 = pneg %p38
        $region38: #{tpu_custom_call.1} parent=35 // pred_check_branch
          %213 = sbr.rel (%p211) target = $region40
        $region39: #{tpu_custom_call.1} parent=35 // pred_region
          %214 = dma.done [#allocation3], 256
        $region40: #{tpu_custom_call.1} parent=35 // pred_fallthru
          _
        %s215 = sand.u32 %s51, 1
        %s216 = scalar_lea.sflag [#allocation6], %s215
        %s217 = sand.u32 %s51, 1
        %s218 = smul.addr %s217, 256
        %s219 = scalar_lea.vmem [#allocation5], %s218
        // Predicated region
        $region41: #{tpu_custom_call.1} parent=35 // pred_check
          %p220 = pneg %p64
        $region42: #{tpu_custom_call.1} parent=35 // pred_check_branch
          %222 = sbr.rel (%p220) target = $region44
        $region43: #{tpu_custom_call.1} parent=35 // pred_region
          %223 = dma.done %s216, 4096
        $region44: #{tpu_custom_call.1} parent=35 // pred_fallthru
          _
        %p224 = pneg %p38
        %p225 = pneg %p35
        %s226 = sand.u32 %s51, 1
        %s227 = scalar_lea.sflag [#allocation6], %s226
        %s228 = sand.u32 %s51, 1
        %s229 = smul.addr %s228, 256
        %s230 = scalar_lea.vmem [#allocation5], %s229
        %p231 = pneg %p64
        %p232 = pneg %p61
        %p233 = scmp.lt.s32.totalorder %s22, 1
        %s234 = scalar_select %p233, %s22, 1
        %s235 = scalar_lea.vmem %s2, %s234
        %p236 = pneg %p90
        %p237 = pneg %p87
        %p238 = scmp.lt.s32.totalorder %s22, 1
        %s239 = scalar_select %p238, %s22, 1
        %s240 = scalar_lea.vmem %s3, %s239
        %p241 = pneg %p116
        %p242 = pneg %p113
        %p243 = pneg %p142
        %p244 = pneg %p139
        %s245 = sand.u32 %s129, 1
        %s246 = scalar_lea.sflag [#allocation4], %s245
        %s247 = sand.u32 %s129, 1
        %s248 = smul.addr %s247, 8
        %s249 = scalar_lea.vmem [#allocation7], %s248
        %p250 = scmp.lt.s32.totalorder %s22, 1
        %s251 = scalar_select %p250, %s22, 1
        %s252 = scalar_lea.vmem %s2, %s251
        %p253 = scmp.lt.s32.totalorder %s22, 1
        %s254 = scalar_select %p253, %s22, 1
        %s255 = scalar_lea.vmem %s3, %s254
        %v257 = vld [vmem:[#allocation2] sm:$0xff]
        %v258 = vld [vmem:[#allocation2 + $0x8] sm:$0xff]
        %v259 = vld [vmem:[%s219] sm:$0xf]
        %v260 = vld [vmem:[%s219 + $0x4] sm:$0xf]
        %v261 = vld [vmem:[%s219 + $0x8] sm:$0xf]
        %v262 = vld [vmem:[%s219 + $0xc] sm:$0xf]
        %v263 = vld [vmem:[%s219 + $0x10] sm:$0xf]
        %v264 = vld [vmem:[%s219 + $0x14] sm:$0xf]
        %v265 = vld [vmem:[%s219 + $0x18] sm:$0xf]
        %v266 = vld [vmem:[%s219 + $0x1c] sm:$0xf]
        %v267 = vld [vmem:[%s219 + $0x20] sm:$0xf]
        %v268 = vld [vmem:[%s219 + $0x24] sm:$0xf]
        %v269 = vld [vmem:[%s219 + $0x28] sm:$0xf]
        %v270 = vld [vmem:[%s219 + $0x2c] sm:$0xf]
        %v271 = vld [vmem:[%s219 + $0x30] sm:$0xf]
        %v272 = vld [vmem:[%s219 + $0x34] sm:$0xf]
        %v273 = vld [vmem:[%s219 + $0x38] sm:$0xf]
        %v274 = vld [vmem:[%s219 + $0x3c] sm:$0xf]
        %v275 = vld [vmem:[%s219 + $0x40] sm:$0xf]
        %v276 = vld [vmem:[%s219 + $0x44] sm:$0xf]
        %v277 = vld [vmem:[%s219 + $0x48] sm:$0xf]
        %v278 = vld [vmem:[%s219 + $0x4c] sm:$0xf]
        %v279 = vld [vmem:[%s219 + $0x50] sm:$0xf]
        %v280 = vld [vmem:[%s219 + $0x54] sm:$0xf]
        %v281 = vld [vmem:[%s219 + $0x58] sm:$0xf]
        %v282 = vld [vmem:[%s219 + $0x5c] sm:$0xf]
        %v283 = vld [vmem:[%s219 + $0x60] sm:$0xf]
        %v284 = vld [vmem:[%s219 + $0x64] sm:$0xf]
        %v285 = vld [vmem:[%s219 + $0x68] sm:$0xf]
        %v286 = vld [vmem:[%s219 + $0x6c] sm:$0xf]
        %v287 = vld [vmem:[%s219 + $0x70] sm:$0xf]
        %v288 = vld [vmem:[%s219 + $0x74] sm:$0xf]
        %v289 = vld [vmem:[%s219 + $0x78] sm:$0xf]
        %v290 = vld [vmem:[%s219 + $0x7c] sm:$0xf]
        %v291 = vld [vmem:[%s219 + $0x80] sm:$0xf]
        %v292 = vld [vmem:[%s219 + $0x84] sm:$0xf]
        %v293 = vld [vmem:[%s219 + $0x88] sm:$0xf]
        %v294 = vld [vmem:[%s219 + $0x8c] sm:$0xf]
        %v295 = vld [vmem:[%s219 + $0x90] sm:$0xf]
        %v296 = vld [vmem:[%s219 + $0x94] sm:$0xf]
        %v297 = vld [vmem:[%s219 + $0x98] sm:$0xf]
        %v298 = vld [vmem:[%s219 + $0x9c] sm:$0xf]
        %v299 = vld [vmem:[%s219 + $0xa0] sm:$0xf]
        %v300 = vld [vmem:[%s219 + $0xa4] sm:$0xf]
        %v301 = vld [vmem:[%s219 + $0xa8] sm:$0xf]
        %v302 = vld [vmem:[%s219 + $0xac] sm:$0xf]
        %v303 = vld [vmem:[%s219 + $0xb0] sm:$0xf]
        %v304 = vld [vmem:[%s219 + $0xb4] sm:$0xf]
        %v305 = vld [vmem:[%s219 + $0xb8] sm:$0xf]
        %v306 = vld [vmem:[%s219 + $0xbc] sm:$0xf]
        %v307 = vld [vmem:[%s219 + $0xc0] sm:$0xf]
        %v308 = vld [vmem:[%s219 + $0xc4] sm:$0xf]
        %v309 = vld [vmem:[%s219 + $0xc8] sm:$0xf]
        %v310 = vld [vmem:[%s219 + $0xcc] sm:$0xf]
        %v311 = vld [vmem:[%s219 + $0xd0] sm:$0xf]
        %v312 = vld [vmem:[%s219 + $0xd4] sm:$0xf]
        %v313 = vld [vmem:[%s219 + $0xd8] sm:$0xf]
        %v314 = vld [vmem:[%s219 + $0xdc] sm:$0xf]
        %v315 = vld [vmem:[%s219 + $0xe0] sm:$0xf]
        %v316 = vld [vmem:[%s219 + $0xe4] sm:$0xf]
        %v317 = vld [vmem:[%s219 + $0xe8] sm:$0xf]
        %v318 = vld [vmem:[%s219 + $0xec] sm:$0xf]
        %v319 = vld [vmem:[%s219 + $0xf0] sm:$0xf]
        %v320 = vld [vmem:[%s219 + $0xf4] sm:$0xf]
        %v321 = vld [vmem:[%s219 + $0xf8] sm:$0xf]
        %v322 = vld [vmem:[%s219 + $0xfc] sm:$0xf]
        %v325 = vunpack.c.l.b16 %v257
        %v326 = vunpack.c.h.b16 %v257
        %v327 = vunpack.c.l.b16 %v258
        %v328 = vunpack.c.h.b16 %v258
        %v329 = vpack.c.b16 %v325, %v325
        %v330 = vpack.c.b16 %v326, %v326
        %v331 = vpack.c.b16 %v327, %v327
        %v332 = vpack.c.b16 %v328, %v328
        %v401 = vunpack.c.l.b16 %v259
        %v402 = vunpack.c.l.b16 %v260
        %v403 = vunpack.c.l.b16 %v261
        %v404 = vunpack.c.l.b16 %v262
        %v405 = vunpack.c.l.b16 %v263
        %v406 = vunpack.c.l.b16 %v264
        %v407 = vunpack.c.l.b16 %v265
        %v408 = vunpack.c.l.b16 %v266
        %v409 = vunpack.c.l.b16 %v267
        %v410 = vunpack.c.l.b16 %v268
        %v411 = vunpack.c.l.b16 %v269
        %v412 = vunpack.c.l.b16 %v270
        %v413 = vunpack.c.l.b16 %v271
        %v414 = vunpack.c.l.b16 %v272
        %v415 = vunpack.c.l.b16 %v273
        %v416 = vunpack.c.l.b16 %v274
        %v417 = vunpack.c.l.b16 %v275
        %v418 = vunpack.c.l.b16 %v276
        %v419 = vunpack.c.l.b16 %v277
        %v420 = vunpack.c.l.b16 %v278
        %v421 = vunpack.c.l.b16 %v279
        %v422 = vunpack.c.l.b16 %v280
        %v423 = vunpack.c.l.b16 %v281
        %v424 = vunpack.c.l.b16 %v282
        %v425 = vunpack.c.l.b16 %v283
        %v426 = vunpack.c.l.b16 %v284
        %v427 = vunpack.c.l.b16 %v285
        %v428 = vunpack.c.l.b16 %v286
        %v429 = vunpack.c.l.b16 %v287
        %v430 = vunpack.c.l.b16 %v288
        %v431 = vunpack.c.l.b16 %v289
        %v432 = vunpack.c.l.b16 %v290
        %v433 = vunpack.c.l.b16 %v291
        %v434 = vunpack.c.l.b16 %v292
        %v435 = vunpack.c.l.b16 %v293
        %v436 = vunpack.c.l.b16 %v294
        %v437 = vunpack.c.l.b16 %v295
        %v438 = vunpack.c.l.b16 %v296
        %v439 = vunpack.c.l.b16 %v297
        %v440 = vunpack.c.l.b16 %v298
        %v441 = vunpack.c.l.b16 %v299
        %v442 = vunpack.c.l.b16 %v300
        %v443 = vunpack.c.l.b16 %v301
        %v444 = vunpack.c.l.b16 %v302
        %v445 = vunpack.c.l.b16 %v303
        %v446 = vunpack.c.l.b16 %v304
        %v447 = vunpack.c.l.b16 %v305
        %v448 = vunpack.c.l.b16 %v306
        %v449 = vunpack.c.l.b16 %v307
        %v450 = vunpack.c.l.b16 %v308
        %v451 = vunpack.c.l.b16 %v309
        %v452 = vunpack.c.l.b16 %v310
        %v453 = vunpack.c.l.b16 %v311
        %v454 = vunpack.c.l.b16 %v312
        %v455 = vunpack.c.l.b16 %v313
        %v456 = vunpack.c.l.b16 %v314
        %v457 = vunpack.c.l.b16 %v315
        %v458 = vunpack.c.l.b16 %v316
        %v459 = vunpack.c.l.b16 %v317
        %v460 = vunpack.c.l.b16 %v318
        %v461 = vunpack.c.l.b16 %v319
        %v462 = vunpack.c.l.b16 %v320
        %v463 = vunpack.c.l.b16 %v321
        %v464 = vunpack.c.l.b16 %v322
        %v465 = vpack.c.b16 %v402, %v401
        %v466 = vpack.c.b16 %v404, %v403
        %v467 = vpack.c.b16 %v406, %v405
        %v468 = vpack.c.b16 %v408, %v407
        %v469 = vpack.c.b16 %v410, %v409
        %v470 = vpack.c.b16 %v412, %v411
        %v471 = vpack.c.b16 %v414, %v413
        %v472 = vpack.c.b16 %v416, %v415
        %v473 = vpack.c.b16 %v418, %v417
        %v474 = vpack.c.b16 %v420, %v419
        %v475 = vpack.c.b16 %v422, %v421
        %v476 = vpack.c.b16 %v424, %v423
        %v477 = vpack.c.b16 %v426, %v425
        %v478 = vpack.c.b16 %v428, %v427
        %v479 = vpack.c.b16 %v430, %v429
        %v480 = vpack.c.b16 %v432, %v431
        %v481 = vpack.c.b16 %v434, %v433
        %v482 = vpack.c.b16 %v436, %v435
        %v483 = vpack.c.b16 %v438, %v437
        %v484 = vpack.c.b16 %v440, %v439
        %v485 = vpack.c.b16 %v442, %v441
        %v486 = vpack.c.b16 %v444, %v443
        %v487 = vpack.c.b16 %v446, %v445
        %v488 = vpack.c.b16 %v448, %v447
        %v489 = vpack.c.b16 %v450, %v449
        %v490 = vpack.c.b16 %v452, %v451
        %v491 = vpack.c.b16 %v454, %v453
        %v492 = vpack.c.b16 %v456, %v455
        %v493 = vpack.c.b16 %v458, %v457
        %v494 = vpack.c.b16 %v460, %v459
        %v495 = vpack.c.b16 %v462, %v461
        %v496 = vpack.c.b16 %v464, %v463
        %529 = vmatprep.subr.bf16.mxu0 0
        %530 = vmatpush1.bf16.msra.mxu0 %v465
        %531 = vmatprep.subr.bf16.mxu0 0
        %532 = vmatpush1.bf16.msra.mxu0 %v466
        %533 = vmatprep.subr.bf16.mxu0 0
        %534 = vmatpush1.bf16.msra.mxu0 %v467
        %535 = vmatprep.subr.bf16.mxu0 0
        %536 = vmatpush1.bf16.msra.mxu0 %v468
        %537 = vmatprep.subr.bf16.mxu0 0
        %538 = vmatpush1.bf16.msra.mxu0 %v469
        %539 = vmatprep.subr.bf16.mxu0 0
        %540 = vmatpush1.bf16.msra.mxu0 %v470
        %541 = vmatprep.subr.bf16.mxu0 0
        %542 = vmatpush1.bf16.msra.mxu0 %v471
        %543 = vmatprep.subr.bf16.mxu0 0
        %544 = vmatpush1.bf16.msra.mxu0 %v472
        %545 = vmatprep.subr.bf16.mxu0 0
        %546 = vmatpush1.bf16.msra.mxu0 %v473
        %547 = vmatprep.subr.bf16.mxu0 0
        %548 = vmatpush1.bf16.msra.mxu0 %v474
        %549 = vmatprep.subr.bf16.mxu0 0
        %550 = vmatpush1.bf16.msra.mxu0 %v475
        %551 = vmatprep.subr.bf16.mxu0 0
        %552 = vmatpush1.bf16.msra.mxu0 %v476
        %553 = vmatprep.subr.bf16.mxu0 0
        %554 = vmatpush1.bf16.msra.mxu0 %v477
        %555 = vmatprep.subr.bf16.mxu0 0
        %556 = vmatpush1.bf16.msra.mxu0 %v478
        %557 = vmatprep.subr.bf16.mxu0 0
        %558 = vmatpush1.bf16.msra.mxu0 %v479
        %559 = vmatprep.subr.bf16.mxu0 0
        %560 = vmatpush1.bf16.msra.mxu0 %v480
        %561 = vmatprep.mubr.bf16.mxu0 %v330
        %562 = vmatmul.mubr.bf16.gmra.mrb[0].mxu0 %v329
        %v563 = vpop.f32.mrb[0].mxu0
        %v564 = vadd.f32 0.0, %v563
        %v565 = vpop.f32.mrb[0].mxu0
        %v566 = vpop.f32.mrb[0].mxu0
        %v567 = vpop.f32.mrb[0].mxu0
        %568 = vdwg.mxu0
        %569 = vmatprep.subr.bf16.mxu0 0
        %570 = vmatpush1.bf16.msra.mxu0 %v481
        %571 = vmatprep.subr.bf16.mxu0 0
        %572 = vmatpush1.bf16.msra.mxu0 %v482
        %573 = vmatprep.subr.bf16.mxu0 0
        %574 = vmatpush1.bf16.msra.mxu0 %v483
        %575 = vmatprep.subr.bf16.mxu0 0
        %576 = vmatpush1.bf16.msra.mxu0 %v484
        %577 = vmatprep.subr.bf16.mxu0 0
        %578 = vmatpush1.bf16.msra.mxu0 %v485
        %579 = vmatprep.subr.bf16.mxu0 0
        %580 = vmatpush1.bf16.msra.mxu0 %v486
        %581 = vmatprep.subr.bf16.mxu0 0
        %582 = vmatpush1.bf16.msra.mxu0 %v487
        %583 = vmatprep.subr.bf16.mxu0 0
        %584 = vmatpush1.bf16.msra.mxu0 %v488
        %585 = vmatprep.subr.bf16.mxu0 0
        %586 = vmatpush1.bf16.msra.mxu0 %v489
        %587 = vmatprep.subr.bf16.mxu0 0
        %588 = vmatpush1.bf16.msra.mxu0 %v490
        %589 = vmatprep.subr.bf16.mxu0 0
        %590 = vmatpush1.bf16.msra.mxu0 %v491
        %591 = vmatprep.subr.bf16.mxu0 0
        %592 = vmatpush1.bf16.msra.mxu0 %v492
        %593 = vmatprep.subr.bf16.mxu0 0
        %594 = vmatpush1.bf16.msra.mxu0 %v493
        %595 = vmatprep.subr.bf16.mxu0 0
        %596 = vmatpush1.bf16.msra.mxu0 %v494
        %597 = vmatprep.subr.bf16.mxu0 0
        %598 = vmatpush1.bf16.msra.mxu0 %v495
        %599 = vmatprep.subr.bf16.mxu0 0
        %600 = vmatpush1.bf16.msra.mxu0 %v496
        %601 = vmatprep.mubr.bf16.mxu0 %v332
        %602 = vmatmul.mubr.bf16.gmra.mrb[0].mxu0 %v331
        %v603 = vpop.f32.mrb[0].mxu0
        %v604 = vadd.f32 %v564, %v603
        %v605 = vpop.f32.mrb[0].mxu0
        %v606 = vpop.f32.mrb[0].mxu0
        %v607 = vpop.f32.mrb[0].mxu0
        %608 = vdwg.mxu0
        %v609 = vrot.slane %v604, 4
        %v610 = vadd.f32 %v604, %v609
        %v611 = vrot.slane %v610, 2
        %v612 = vadd.f32 %v610, %v611
        %v613 = vrot.slane %v612, 1
        %v614 = vadd.f32 %v612, %v613
        %v615 = vmul.f32 %v614, 0.125
        %v616 = vsub.f32 %v604, %v615
        %v617 = vmul.f32 %v616, %v616
        %v618 = vrot.slane %v617, 4
        %v619 = vadd.f32 %v617, %v618
        %v620 = vrot.slane %v619, 2
        %v621 = vadd.f32 %v619, %v620
        %v622 = vrot.slane %v621, 1
        %v623 = vadd.f32 %v621, %v622
        %v624 = vmul.f32 %v623, 0.125
        %v625 = vadd.f32 %v624, 1e-05
        %v626 = vrsqrt.pop %v625
        %v627 = vmul.f32 %v616, %v626
        %v628 = vld [vmem:[%s252] sm:$0x1]
        %v630 = vlaneseq
        %v631 = vshrl.u32 %v630, 7
        %v632 = vsub.s32 0, %v631
        %v633 = vrot.slane %v628, %v632
        %v635 = vmul.f32 %v627, %v633
        %v636 = vld [vmem:[%s255] sm:$0x1]
        %v638 = vlaneseq
        %v639 = vshrl.u32 %v638, 7
        %v640 = vsub.s32 0, %v639
        %v641 = vrot.slane %v636, %v640
        %v643 = vadd.f32 %v635, %v641
        %644 = vst [vmem:[%s249] sm:$0xff] %v643
        %s645 = sand.u32 %s129, 1
        %s646 = scalar_lea.sflag [#allocation4], %s645
        %s647 = sand.u32 %s129, 1
        %s648 = smul.addr %s647, 8
        %s649 = scalar_lea.vmem [#allocation7], %s648
        // Predicated region
        $region45: #{tpu_custom_call.1} parent=35 // pred_check
          %p650 = pneg %p139
        $region46: #{tpu_custom_call.1} parent=35 // pred_check_branch
          %652 = sbr.rel (%p650) target = $region48
        $region47: #{tpu_custom_call.1} parent=35 // pred_region
          %s654 = ssub.s32 128, 128
          %655 = vsyncadd %s646, %s654
          %s656 = smul.addr %s22, 128
          %s657 = scalar_lea.hbm %s4, %s656
          %s659 = sshll.u32 %s649, 4
          %s660 = int_to_ptr.vmem [resolvable:$true] %s659
          %662 = dma.vmem_to_hbm [thread:$0]  %s660, 128, %s657, %s646
        $region48: #{tpu_custom_call.1} parent=35 // pred_fallthru
          _
      $region36: #{tpu_custom_call.1} parent=5 // pred_fallthru
        _
      %p663 = scmp.le.s32.totalorder 2, %s17
      // Predicated region
      $region49: #{tpu_custom_call.1} parent=5 // pred_check
        %p664 = pneg %p663
      $region50: #{tpu_custom_call.1} parent=5 // pred_check_branch
        %666 = sbr.rel (%p664) target = $region52
      $region51: #{tpu_custom_call.1} parent=5 // pred_region
        %s667 = ssub.s32 %s17, 2
        // Predicated region
        $region53: #{tpu_custom_call.1} parent=51 // pred_check
          %p668 = pneg %p145
        $region54: #{tpu_custom_call.1} parent=51 // pred_check_branch
          %670 = sbr.rel (%p668) target = $region56
        $region55: #{tpu_custom_call.1} parent=51 // pred_region
          %s671 = sand.u32 %s130, 1
          %s672 = scalar_lea.sflag [#allocation4], %s671
          %s673 = sand.u32 %s130, 1
          %s674 = smul.addr %s673, 8
          %s675 = scalar_lea.vmem [#allocation7], %s674
          %676 = dma.done %s672, 128
        $region56: #{tpu_custom_call.1} parent=51 // pred_fallthru
          _
      $region52: #{tpu_custom_call.1} parent=5 // pred_fallthru
        _
    $region6: #{tpu_custom_call.1} parent=1 // loop_footer
      %s21 = sadd.s32 1, %s17
    $region7: #{tpu_custom_call.1} parent=1 // loop_footer_branch
      %16 = sbr.rel target = $region3
    $region8: #{tpu_custom_call.1} parent=1 // loop_exit
      _
    %677 = vsyncpa [#allocation3], 1
    %s678 = scalar_lea.sflag [#allocation3], 1
    %679 = vsyncpa %s678, 1
    %680 = vsyncpa [#allocation6], 1
    %s681 = scalar_lea.sflag [#allocation6], 1
    %682 = vsyncpa %s681, 1
    %683 = vsyncpa [#allocation4], 1
    %s684 = scalar_lea.sflag [#allocation4], 1
    %685 = vsyncpa %s684, 1

</llo_original>
